<compile_context>
chip_gen: v5e
topology: v5e:2x2
jax: 0.10.0
libtpu: 0.0.40
codegen_flags: <defaults>
</compile_context>

<pallas_src>
import jax
import jax.numpy as jnp
from jax import lax
from jax.experimental import pallas as pl
from jax.experimental.pallas import tpu as pltpu


def _fused_kernel(x_ref, w_ref, b_ref, o_ref):
    x = x_ref[...]                          # (TB, D_in)   f32
    w = w_ref[...]                          # (D_out, D_in) resident across grid
    b = b_ref[...]                          # (1, D_out)    resident across grid

    # Linear: y[n, o] = sum_i x[n, i] * w[o, i] + b[o].  Contract on the last
    # dim of BOTH operands -> no w.T / XLU relayout inside the kernel.
    y = lax.dot_general(
        x, w,
        dimension_numbers=(((1,), (1,)), ((), ())),
        preferred_element_type=jnp.float32,
    ) + b                                   # (TB, D_out)

    # Per-batch symmetric outer product: out[n, i, j] = y[n, i] * y[n, j].
    # Single lane->sublane relayout of the row factor per batch block, then a
    # VPU broadcast-multiply; the kernel is store/HBM-bound, not MXU-bound,
    # so we deliberately do NOT turn this into a K=1 batched matmul.
    o_ref[...] = (y[:, :, None] * y[:, None, :]).astype(o_ref.dtype)


def _pick_batch_tile(B, cap=512):
    """Batch tile: full batch if tiny, else a multiple of 8 capped at `cap`.

    The output block's leading dim has no (8,128) constraint, but the x block
    (TB, D_in) has TB as its second-to-last dim, so TB must be a multiple of 8
    or equal to B.  We also aim for >= 2 grid blocks so v7x's two TensorCores
    can both be used via dimension_semantics=("parallel",).
    """
    if B <= 8:
        return B
    half = (B // 2) // 8 * 8                # ~half the batch, 8-aligned
    return min(cap, max(8, half))


def permute_linear_fusion(x, weight, bias):
    """x: (B, D_in, 1); weight: (D_out, D_in); bias: (D_out,) -> (B, D_out, D_out)."""
    B, D_in, _ = x.shape
    D_out = weight.shape[0]

    x2d = jnp.squeeze(x, axis=-1)           # (B, D_in) == permute(0,2,1)[:, 0, :]
    b2d = bias.reshape(1, D_out)            # metadata-only reshape

    TB = _pick_batch_tile(B)
    grid = (pl.cdiv(B, TB),)

    # VMEM budget: double-buffered x + output tiles, resident weight/bias,
    # plus ~1 MiB headroom.  Clamp to [16 MiB, 48 MiB]: above v5e's 16 MiB
    # default scoped limit, below v7x's 64 MiB physical VMEM.
    out_tile_bytes = TB * D_out * D_out * 4
    x_tile_bytes = TB * D_in * 4
    resident_bytes = D_out * D_in * 4 + D_out * 4
    budget = 2 * (out_tile_bytes + x_tile_bytes) + 2 * resident_bytes + (1 << 20)
    vmem_limit = int(min(max(budget, 16 << 20), 48 << 20))

    # Partial final batch block (B % TB != 0): compute runs on undefined tail
    # rows but the writeback is masked to valid rows; fine because there is no
    # accumulation over the batch axis.
    out = pl.pallas_call(
        _fused_kernel,
        out_shape=jax.ShapeDtypeStruct((B, D_out, D_out), jnp.float32),
        grid=grid,
        in_specs=[
            pl.BlockSpec((TB, D_in), lambda i: (i, 0)),          # x tile per batch block
            pl.BlockSpec((D_out, D_in), lambda i: (0, 0)),       # weight: resident
            pl.BlockSpec((1, D_out), lambda i: (0, 0)),          # bias:   resident
        ],
        out_specs=pl.BlockSpec((TB, D_out, D_out), lambda i: (i, 0, 0)),
        compiler_params=pltpu.CompilerParams(
            dimension_semantics=("parallel",),
            vmem_limit_bytes=vmem_limit,
        ),
    )(x2d, weight, b2d)

    return out                              # (B, D_out, D_out)


def _reference(x, weight, bias):
    x1 = jnp.transpose(x, (0, 2, 1))                   # (B, 1, D)
    x2 = jnp.einsum("bsd,od->bso", x1, weight) + bias  # (B, 1, D)
    x3 = jnp.transpose(x2, (0, 2, 1))                  # (B, D, 1)
    return x2 * x3                                     # (B, D, D)


if __name__ == "__main__":
    B, D = 10, 20
    key = jax.random.PRNGKey(0)
    kx, kw, kb = jax.random.split(key, 3)

    x = jax.random.normal(kx, (B, D, 1), dtype=jnp.float32)
    # Deterministic Linear(D, D) params (PyTorch-style uniform init bound).
    bound = 1.0 / jnp.sqrt(jnp.float32(D))
    weight = jax.random.uniform(kw, (D, D), jnp.float32, -bound, bound)
    bias = jax.random.uniform(kb, (D,), jnp.float32, -bound, bound)

    out = jax.block_until_ready(permute_linear_fusion(x, weight, bias))

    ref = _reference(x, weight, bias)
    assert out.shape == (B, D, D), out.shape
    assert jnp.allclose(out, ref, atol=1e-5, rtol=1e-5), "mismatch vs reference"
    print("KERNEL_OK")
</pallas_src>

<mosaic_0001>
module attributes {stable_mosaic.version = 11 : i64} {
  func.func @_fused_kernel(%arg0: i32, %arg1: memref<8x20xf32, #tpu.memory_space<vmem>>, %arg2: memref<20x20xf32, #tpu.memory_space<vmem>>, %arg3: memref<1x20xf32, #tpu.memory_space<vmem>>, %arg4: memref<8x20x20xf32, #tpu.memory_space<vmem>>) attributes {dimension_semantics = [#tpu.dimension_semantics<parallel>], iteration_bounds = array<i64: 2>, scalar_prefetch = 0 : i64, scratch_operands = 0 : i64, tpu.core_type = #tpu.core_type<tc>, window_params = [{transform_indices = @transform_0, window_bounds = array<i64: 8, 20>}, {pipeline_mode = #tpu.pipeline_mode<synchronous>, transform_indices = @transform_1, window_bounds = array<i64: 20, 20>}, {pipeline_mode = #tpu.pipeline_mode<synchronous>, transform_indices = @transform_2, window_bounds = array<i64: 1, 20>}, {transform_indices = @transform_3, window_bounds = array<i64: 8, 20, 20>}]} {
    %c0 = arith.constant 0 : index
    %c0_0 = arith.constant 0 : index
    %0 = vector.load %arg1[%c0, %c0_0] : memref<8x20xf32, #tpu.memory_space<vmem>>, vector<8x20xf32>
    %c0_1 = arith.constant 0 : index
    %c0_2 = arith.constant 0 : index
    %1 = vector.load %arg2[%c0_1, %c0_2] : memref<20x20xf32, #tpu.memory_space<vmem>>, vector<20x20xf32>
    %c0_3 = arith.constant 0 : index
    %c0_4 = arith.constant 0 : index
    %2 = vector.load %arg3[%c0_3, %c0_4] : memref<1x20xf32, #tpu.memory_space<vmem>>, vector<1x20xf32>
    %cst = arith.constant dense<0.000000e+00> : vector<8x20xf32>
    %3 = tpu.matmul %0, %1, %cst {dimension_numbers = #tpu.dot_dimension_numbers<[1], [1], [0], [0], [0, 0, 1, 0], [], []>} : vector<8x20xf32>, vector<20x20xf32>, vector<8x20xf32> -> vector<8x20xf32>
    %4 = vector.broadcast %2 : vector<1x20xf32> to vector<8x20xf32>
    %5 = arith.addf %3, %4 : vector<8x20xf32>
    %6 = vector.shape_cast %5 : vector<8x20xf32> to vector<8x20x1xf32>
    %7 = vector.shape_cast %5 : vector<8x20xf32> to vector<8x1x20xf32>
    %8 = vector.broadcast %6 : vector<8x20x1xf32> to vector<8x20x20xf32>
    %9 = vector.broadcast %7 : vector<8x1x20xf32> to vector<8x20x20xf32>
    %10 = arith.mulf %8, %9 : vector<8x20x20xf32>
    %c0_5 = arith.constant 0 : index
    %c0_6 = arith.constant 0 : index
    %c0_7 = arith.constant 0 : index
    %11 = vector.load %arg4[%c0_5, %c0_6, %c0_7] : memref<8x20x20xf32, #tpu.memory_space<vmem>>, vector<8x20x20xf32>
    tpu.vector_store %arg4[%c0_5, %c0_6, %c0_7], %10 {strides = array<i32>} : memref<8x20x20xf32, #tpu.memory_space<vmem>>, vector<8x20x20xf32>,
    return
  }
  func.func @transform_0(%arg0: i32) -> (i32, i32) {
    %c0_i32 = arith.constant 0 : i32
    %c0_i32_0 = arith.constant 0 : i32
    return %arg0, %c0_i32 : i32, i32
  }
  func.func @transform_1(%arg0: i32) -> (i32, i32) {
    %c0_i32 = arith.constant 0 : i32
    %c0_i32_0 = arith.constant 0 : i32
    %c0_i32_1 = arith.constant 0 : i32
    return %c0_i32, %c0_i32_0 : i32, i32
  }
  func.func @transform_2(%arg0: i32) -> (i32, i32) {
    %c0_i32 = arith.constant 0 : i32
    %c0_i32_0 = arith.constant 0 : i32
    %c0_i32_1 = arith.constant 0 : i32
    return %c0_i32, %c0_i32_0 : i32, i32
  }
  func.func @transform_3(%arg0: i32) -> (i32, i32, i32) {
    %c0_i32 = arith.constant 0 : i32
    %c0_i32_0 = arith.constant 0 : i32
    %c0_i32_1 = arith.constant 0 : i32
    return %arg0, %c0_i32, %c0_i32_0 : i32, i32, i32
  }
}

</mosaic_0001>

<llo_original>
// kernel: tpu_custom_call.1
$region0: #{tpu_custom_call.1}
  #allocation0 [shape = 'u32[]', space=smem, size = 0x4, offset = 0x4, fixed_abs, tag = 'smem constant byte address 0x4 - core index']
  #allocation1 [shape = 'u32[72,128]{1,0:T(1,128)}', space=vmem, size = 0x9000, scoped, tag = 'internal scratch']
  %s0 = inlined_call_operand.hbm [shape: f32[10,20], index: 0, kind: input, shape index: {}]
  %s1 = inlined_call_operand.hbm [shape: f32[20,20], index: 1, kind: input, shape index: {}]
  %s2 = inlined_call_operand.vmem [shape: f32[1,20], index: 2, kind: input, shape index: {}]
  %s3 = inlined_call_operand.hbm [shape: f32[10,20,20], index: 3, kind: output, shape index: {}]
  %s4 = sld [smem:[#allocation0]]
  $region53: #{tpu_custom_call.1} parent=0
    _
  %s6 = ssub.s32 1, %s4
  %s7 = scalar_select 0, %s6, %s4
  $region1: #{tpu_custom_call.1} parent=0
    #allocation2 [shape = 'u8[8192]{0}', space=vmem, size = 0x2000, scoped, tag = 'input window, operand 0']
    #allocation3 [shape = 's32[2]{0}', space=sflag, size = 0x8, scoped, tag = 'scoped memory for tpu_custom_call.1']
    #allocation4 [shape = 's32[2]{0}', space=sflag, size = 0x8, scoped, tag = 'scoped memory for tpu_custom_call.1']
    #allocation5 [shape = 'u8[12288]{0}', space=vmem, size = 0x3000, scoped, tag = 'input window, operand 1, single buffered']
    #allocation6 [shape = 's32[1]{0}', space=sflag, size = 0x4, scoped, tag = 'scoped memory for tpu_custom_call.1']
    #allocation7 [shape = 'u8[196608]{0}', space=vmem, size = 0x30000, scoped, tag = 'output window, operand 0']
    %8 = vsyncpa [#allocation3], 0
    %s9 = scalar_lea.sflag [#allocation3], 1
    %10 = vsyncpa %s9, 0
    %11 = vsyncpa [#allocation6], 0
    %12 = vsyncpa [#allocation4], 0
    %s13 = scalar_lea.sflag [#allocation4], 1
    %14 = vsyncpa %s13, 0
    loop: start=0, step=1, limit=4
    $region2: #{tpu_custom_call.1} parent=1 // loop_pre_header
      _
    $region3: #{tpu_custom_call.1} parent=1 // loop_header
      %s16 = sphi 0, %s20
      %p17 = scmp.ge.s32.totalorder %s16, 4
      %s26 = sphi 0, %s28
      %s29 = sphi 0, %s26
      %s30 = sphi 0, %s29
      %s46 = sphi 0, %s30
      %s50 = sphi 0, %s50
      %s52 = sphi 0, %s50
      %s53 = sphi 0, %s52
      %s67 = sphi 0, %s53
      %s71 = sphi 0, %s71
      %s73 = sphi 0, %s71
      %s74 = sphi 0, %s73
      %s88 = sphi 0, %s74
      %s94 = sphi 0, %s96
      %s97 = sphi 0, %s94
      %s98 = sphi 0, %s97
      %s114 = sphi 0, %s98
    $region4: #{tpu_custom_call.1} parent=1 // loop_header_branch
      %19 = sbr.rel (%p17) target = $region8
    $region5: #{tpu_custom_call.1} parent=1 // loop_body
      %s21 = ssub.s32 %s16, 1
      %s22 = ssub.s32 %s16, 2
      %s23 = sadd.s32 %s16, 1
      %s24 = ssub.s32 %s16, %s23
      %p25 = scmp.eq.s32.totalorder %s24, 0
      %s27 = sadd.s32 %s26, 1
      %s28 = scalar_select %p25, %s26, %s27
      %p31 = pneg %p25
      %p32 = scmp.eq.s32.totalorder %s16, 1
      %p33 = por %p31, %p32
      %p34 = scmp.ne.s32.totalorder %s26, %s29
      %p35 = scmp.eq.s32.totalorder %s16, 0
      %p36 = por %p34, %p35
      %p37 = scmp.ne.s32.totalorder %s26, %s29
      %p38 = scmp.eq.s32.totalorder %s21, 1
      %p39 = por %p37, %p38
      %p40 = scmp.ne.s32.totalorder %s29, %s30
      %p41 = scmp.eq.s32.totalorder %s21, 0
      %p42 = por %p40, %p41
      %p43 = scmp.ne.s32.totalorder %s29, %s30
      %p44 = scmp.eq.s32.totalorder %s22, 1
      %p45 = por %p43, %p44
      %p47 = scmp.ne.s32.totalorder %s30, %s46
      %p48 = scmp.eq.s32.totalorder %s22, 0
      %p49 = por %p47, %p48
      %s51 = sadd.s32 %s50, 1
      %p54 = scmp.eq.s32.totalorder %s16, 1
      %p55 = scmp.ne.s32.totalorder %s50, %s52
      %p56 = scmp.eq.s32.totalorder %s16, 0
      %p57 = por %p55, %p56
      %p58 = scmp.ne.s32.totalorder %s50, %s52
      %p59 = scmp.eq.s32.totalorder %s21, 1
      %p60 = por %p58, %p59
      %p61 = scmp.ne.s32.totalorder %s52, %s53
      %p62 = scmp.eq.s32.totalorder %s21, 0
      %p63 = por %p61, %p62
      %p64 = scmp.ne.s32.totalorder %s52, %s53
      %p65 = scmp.eq.s32.totalorder %s22, 1
      %p66 = por %p64, %p65
      %p68 = scmp.ne.s32.totalorder %s53, %s67
      %p69 = scmp.eq.s32.totalorder %s22, 0
      %p70 = por %p68, %p69
      %s72 = sadd.s32 %s71, 1
      %p75 = scmp.eq.s32.totalorder %s16, 1
      %p76 = scmp.ne.s32.totalorder %s71, %s73
      %p77 = scmp.eq.s32.totalorder %s16, 0
      %p78 = por %p76, %p77
      %p79 = scmp.ne.s32.totalorder %s71, %s73
      %p80 = scmp.eq.s32.totalorder %s21, 1
      %p81 = por %p79, %p80
      %p82 = scmp.ne.s32.totalorder %s73, %s74
      %p83 = scmp.eq.s32.totalorder %s21, 0
      %p84 = por %p82, %p83
      %p85 = scmp.ne.s32.totalorder %s73, %s74
      %p86 = scmp.eq.s32.totalorder %s22, 1
      %p87 = por %p85, %p86
      %p89 = scmp.ne.s32.totalorder %s74, %s88
      %p90 = scmp.eq.s32.totalorder %s22, 0
      %p91 = por %p89, %p90
      %s92 = ssub.s32 %s16, %s23
      %p93 = scmp.eq.s32.totalorder %s92, 0
      %s95 = sadd.s32 %s94, 1
      %s96 = scalar_select %p93, %s94, %s95
      %p99 = pneg %p93
      %p100 = scmp.eq.s32.totalorder %s16, 1
      %p101 = por %p99, %p100
      %p102 = scmp.ne.s32.totalorder %s94, %s97
      %p103 = scmp.eq.s32.totalorder %s16, 0
      %p104 = por %p102, %p103
      %p105 = scmp.ne.s32.totalorder %s94, %s97
      %p106 = scmp.eq.s32.totalorder %s21, 1
      %p107 = por %p105, %p106
      %p108 = scmp.ne.s32.totalorder %s97, %s98
      %p109 = scmp.eq.s32.totalorder %s21, 0
      %p110 = por %p108, %p109
      %p111 = scmp.ne.s32.totalorder %s97, %s98
      %p112 = scmp.eq.s32.totalorder %s22, 1
      %p113 = por %p111, %p112
      %p115 = scmp.ne.s32.totalorder %s98, %s114
      %p116 = scmp.eq.s32.totalorder %s22, 0
      %p117 = por %p115, %p116
      %p118 = scmp.le.s32.totalorder 1, %s16
      %p119 = scmp.lt.s32.totalorder %s16, 3
      %p120 = pnand %p118, %p119
      %p121 = pneg %p120
      // Predicated region
      $region9: #{tpu_custom_call.1} parent=5 // pred_check
        _
      $region10: #{tpu_custom_call.1} parent=5 // pred_check_branch
        %123 = sbr.rel (%p120) target = $region12
      $region11: #{tpu_custom_call.1} parent=5 // pred_region
        %s124 = ssub.s32 %s16, 1
        // Predicated region
        $region13: #{tpu_custom_call.1} parent=11 // pred_check
          %p125 = pneg %p63
        $region14: #{tpu_custom_call.1} parent=11 // pred_check_branch
          %127 = sbr.rel (%p125) target = $region16
        $region15: #{tpu_custom_call.1} parent=11 // pred_region
          %129 = vsyncadd [#allocation6], 0
          %s130 = sshll.u32 %s1, 4
          %s131 = int_to_ptr.hbm [resolvable:$true] %s130
          %s132 = sshll.u32 [#allocation5], 4
          %s133 = int_to_ptr.vmem [resolvable:$true] %s132
          %138 = dma.hbm_to_vmem [thread:$0]  %s131, 384, %s133, [#allocation6], 128, 128, 8
        $region16: #{tpu_custom_call.1} parent=11 // pred_fallthru
          _
        // Predicated region
        $region17: #{tpu_custom_call.1} parent=11 // pred_check
          %p139 = pneg %p84
        $region18: #{tpu_custom_call.1} parent=11 // pred_check_branch
          %141 = sbr.rel (%p139) target = $region20
        $region19: #{tpu_custom_call.1} parent=11 // pred_region
          _
        $region20: #{tpu_custom_call.1} parent=11 // pred_fallthru
          _
      $region12: #{tpu_custom_call.1} parent=5 // pred_fallthru
        _
      %p142 = scmp.lt.s32.totalorder %s16, 2
      // Predicated region
      $region21: #{tpu_custom_call.1} parent=5 // pred_check
        %p143 = pneg %p142
      $region22: #{tpu_custom_call.1} parent=5 // pred_check_branch
        %145 = sbr.rel (%p143) target = $region24
      $region23: #{tpu_custom_call.1} parent=5 // pred_region
        // Predicated region
        $region25: #{tpu_custom_call.1} parent=23 // pred_check
          %p146 = pneg %p36
        $region26: #{tpu_custom_call.1} parent=23 // pred_check_branch
          %148 = sbr.rel (%p146) target = $region28
        $region27: #{tpu_custom_call.1} parent=23 // pred_region
          %s149 = sand.u32 %s26, 1
          %s150 = scalar_lea.sflag [#allocation3], %s149
          %s151 = sand.u32 %s26, 1
          %s152 = smul.addr %s151, 8
          %s153 = scalar_lea.vmem [#allocation2], %s152
          %155 = vsyncadd %s150, 0
          %s156 = smul.addr %s16, 8
          %s157 = scalar_lea.hbm %s0, %s156
          %s159 = sshll.u32 %s157, 4
          %s160 = int_to_ptr.hbm [resolvable:$true] %s159
          %s161 = sshll.u32 %s153, 4
          %s162 = int_to_ptr.vmem [resolvable:$true] %s161
          %164 = dma.hbm_to_vmem [thread:$0]  %s160, 128, %s162, %s150
        $region28: #{tpu_custom_call.1} parent=23 // pred_fallthru
          _
      $region24: #{tpu_custom_call.1} parent=5 // pred_fallthru
        _
      %p165 = scmp.le.s32.totalorder 1, %s16
      %p166 = scmp.lt.s32.totalorder %s16, 3
      %p167 = pnand %p165, %p166
      %p168 = pneg %p167
      // Predicated region
      $region29: #{tpu_custom_call.1} parent=5 // pred_check
        _
      $region30: #{tpu_custom_call.1} parent=5 // pred_check_branch
        %170 = sbr.rel (%p167) target = $region32
      $region31: #{tpu_custom_call.1} parent=5 // pred_region
        %s171 = ssub.s32 %s16, 1
        %s172 = sand.u32 %s29, 1
        %s173 = scalar_lea.sflag [#allocation3], %s172
        %s174 = sand.u32 %s29, 1
        %s175 = smul.addr %s174, 8
        %s176 = scalar_lea.vmem [#allocation2], %s175
        // Predicated region
        $region33: #{tpu_custom_call.1} parent=31 // pred_check
          %p177 = pneg %p42
        $region34: #{tpu_custom_call.1} parent=31 // pred_check_branch
          %179 = sbr.rel (%p177) target = $region36
        $region35: #{tpu_custom_call.1} parent=31 // pred_region
          %181 = dma.done %s173, 128
        $region36: #{tpu_custom_call.1} parent=31 // pred_fallthru
          _
        // Predicated region
        $region37: #{tpu_custom_call.1} parent=31 // pred_check
          %p182 = pneg %p63
        $region38: #{tpu_custom_call.1} parent=31 // pred_check_branch
          %184 = sbr.rel (%p182) target = $region40
        $region39: #{tpu_custom_call.1} parent=31 // pred_region
          %186 = dma.done [#allocation6], 384
        $region40: #{tpu_custom_call.1} parent=31 // pred_fallthru
          _
        %s187 = sand.u32 %s29, 1
        %s188 = scalar_lea.sflag [#allocation3], %s187
        %s189 = sand.u32 %s29, 1
        %s190 = smul.addr %s189, 8
        %s191 = scalar_lea.vmem [#allocation2], %s190
        %p192 = pneg %p42
        %p193 = pneg %p39
        %p194 = pneg %p63
        %p195 = pneg %p60
        %p196 = pneg %p84
        %p197 = pneg %p81
        %p198 = pneg %p110
        %p199 = pneg %p107
        %s200 = sand.u32 %s97, 1
        %s201 = scalar_lea.sflag [#allocation4], %s200
        %s202 = sand.u32 %s97, 1
        %s203 = smul.addr %s202, 192
        %s204 = scalar_lea.vmem [#allocation7], %s203
        %s205 = smul.u32 8, %s21
        %s206 = ssub.s32 10, %s205
        %p207 = scmp.lt.s32.totalorder %s206, 8
        %s208 = scalar_select %p207, %s206, 8
        %s209 = smul.u32 8, %s208
        %s210 = smul.u32 %s209, 3
        %v211 = vld [vmem:[%s176] sm:$0xff]
        %v212 = vld [vmem:[#allocation5] sm:$0xff]
        %v213 = vld [vmem:[#allocation5 + $0x8] sm:$0xff]
        %v214 = vld [vmem:[#allocation5 + $0x10] sm:$0xf]
        %v215 = vld [vmem:[%s2] sm:$0x1]
        %v217 = vperm.slane %v215, 0
        %vm219 = vcmask 162816
        %v221 = vsel %vm219, %v211, 0
        %v224 = vsel %vm219, %v212, 0
        %v227 = vsel %vm219, %v213, 0
        %v230 = vsel %vm219, %v214, 0
        %232 = vmatpush.xpose.msra.mxu0 0.0
        %233 = vmatpush.xpose.msra.mxu0 0.0
        %234 = vmatpush.xpose.msra.mxu0 0.0
        %235 = vmatpush.xpose.msra.mxu0 0.0
        %236 = vmatpush.xpose.msra.mxu0 0.0
        %237 = vmatpush.xpose.msra.mxu0 0.0
        %238 = vmatpush.xpose.msra.mxu0 0.0
        %239 = vmatpush.xpose.msra.mxu0 0.0
        %240 = vmatpush.xpose.msra.mxu0 0.0
        %241 = vmatpush.xpose.msra.mxu0 0.0
        %242 = vmatpush.xpose.msra.mxu0 0.0
        %243 = vmatpush.xpose.msra.mxu0 0.0
        %244 = vmatpush.xpose.msra.mxu0 0.0
        %245 = vmatpush.xpose.msra.mxu0 %v230
        %246 = vmatpush.xpose.msra.mxu0 %v227
        %247 = vmatpush.xpose.msra.mxu0 %v224
        %248 = vmatmul.f32.gmra.mxu0 %v221
        %v249 = vpop.f32.mrf.mxu0
        %v250 = vadd.f32 %v217, %v249
        %251 = vdwg.mxu0
        %v252 = vperm.slane %v250, 0
        %v253 = vlaneseq
        %v254 = vshrl.u32 %v253, 7
        %256 = vset.pattern.permute.xlu0 %v254
        %257 = vperm.xlu0 %256, %v252
        %v258 = vpop.permute.xlu0 %257
        %v259 = vlaneseq
        %v260 = vshrl.u32 %v259, 7
        %v261 = vadd.s32 %v260, 8
        %262 = vset.pattern.permute.xlu0 %v261
        %263 = vperm.xlu0 %262, %v252
        %v264 = vpop.permute.xlu0 %263
        %v265 = vlaneseq
        %v266 = vshrl.u32 %v265, 7
        %v267 = vadd.s32 %v266, 16
        %268 = vset.pattern.permute.xlu0 %v267
        %269 = vperm.xlu0 %268, %v252
        %v270 = vpop.permute.xlu0 %269
        %v271 = vperm.slane %v250, 1
        %v272 = vlaneseq
        %v273 = vshrl.u32 %v272, 7
        %275 = vset.pattern.permute.xlu0 %v273
        %276 = vperm.xlu0 %275, %v271
        %v277 = vpop.permute.xlu0 %276
        %v278 = vlaneseq
        %v279 = vshrl.u32 %v278, 7
        %v280 = vadd.s32 %v279, 8
        %281 = vset.pattern.permute.xlu0 %v280
        %282 = vperm.xlu0 %281, %v271
        %v283 = vpop.permute.xlu0 %282
        %v284 = vlaneseq
        %v285 = vshrl.u32 %v284, 7
        %v286 = vadd.s32 %v285, 16
        %287 = vset.pattern.permute.xlu0 %v286
        %288 = vperm.xlu0 %287, %v271
        %v289 = vpop.permute.xlu0 %288
        %v290 = vperm.slane %v250, 2
        %v291 = vlaneseq
        %v292 = vshrl.u32 %v291, 7
        %294 = vset.pattern.permute.xlu0 %v292
        %295 = vperm.xlu0 %294, %v290
        %v296 = vpop.permute.xlu0 %295
        %v297 = vlaneseq
        %v298 = vshrl.u32 %v297, 7
        %v299 = vadd.s32 %v298, 8
        %300 = vset.pattern.permute.xlu0 %v299
        %301 = vperm.xlu0 %300, %v290
        %v302 = vpop.permute.xlu0 %301
        %v303 = vlaneseq
        %v304 = vshrl.u32 %v303, 7
        %v305 = vadd.s32 %v304, 16
        %306 = vset.pattern.permute.xlu0 %v305
        %307 = vperm.xlu0 %306, %v290
        %v308 = vpop.permute.xlu0 %307
        %v309 = vperm.slane %v250, 3
        %v310 = vlaneseq
        %v311 = vshrl.u32 %v310, 7
        %313 = vset.pattern.permute.xlu0 %v311
        %314 = vperm.xlu0 %313, %v309
        %v315 = vpop.permute.xlu0 %314
        %v316 = vlaneseq
        %v317 = vshrl.u32 %v316, 7
        %v318 = vadd.s32 %v317, 8
        %319 = vset.pattern.permute.xlu0 %v318
        %320 = vperm.xlu0 %319, %v309
        %v321 = vpop.permute.xlu0 %320
        %v322 = vlaneseq
        %v323 = vshrl.u32 %v322, 7
        %v324 = vadd.s32 %v323, 16
        %325 = vset.pattern.permute.xlu0 %v324
        %326 = vperm.xlu0 %325, %v309
        %v327 = vpop.permute.xlu0 %326
        %v328 = vperm.slane %v250, 4
        %v329 = vlaneseq
        %v330 = vshrl.u32 %v329, 7
        %332 = vset.pattern.permute.xlu0 %v330
        %333 = vperm.xlu0 %332, %v328
        %v334 = vpop.permute.xlu0 %333
        %v335 = vlaneseq
        %v336 = vshrl.u32 %v335, 7
        %v337 = vadd.s32 %v336, 8
        %338 = vset.pattern.permute.xlu0 %v337
        %339 = vperm.xlu0 %338, %v328
        %v340 = vpop.permute.xlu0 %339
        %v341 = vlaneseq
        %v342 = vshrl.u32 %v341, 7
        %v343 = vadd.s32 %v342, 16
        %344 = vset.pattern.permute.xlu0 %v343
        %345 = vperm.xlu0 %344, %v328
        %v346 = vpop.permute.xlu0 %345
        %v347 = vperm.slane %v250, 5
        %v348 = vlaneseq
        %v349 = vshrl.u32 %v348, 7
        %351 = vset.pattern.permute.xlu0 %v349
        %352 = vperm.xlu0 %351, %v347
        %v353 = vpop.permute.xlu0 %352
        %v354 = vlaneseq
        %v355 = vshrl.u32 %v354, 7
        %v356 = vadd.s32 %v355, 8
        %357 = vset.pattern.permute.xlu0 %v356
        %358 = vperm.xlu0 %357, %v347
        %v359 = vpop.permute.xlu0 %358
        %v360 = vlaneseq
        %v361 = vshrl.u32 %v360, 7
        %v362 = vadd.s32 %v361, 16
        %363 = vset.pattern.permute.xlu0 %v362
        %364 = vperm.xlu0 %363, %v347
        %v365 = vpop.permute.xlu0 %364
        %v366 = vperm.slane %v250, 6
        %v367 = vlaneseq
        %v368 = vshrl.u32 %v367, 7
        %370 = vset.pattern.permute.xlu0 %v368
        %371 = vperm.xlu0 %370, %v366
        %v372 = vpop.permute.xlu0 %371
        %v373 = vlaneseq
        %v374 = vshrl.u32 %v373, 7
        %v375 = vadd.s32 %v374, 8
        %376 = vset.pattern.permute.xlu0 %v375
        %377 = vperm.xlu0 %376, %v366
        %v378 = vpop.permute.xlu0 %377
        %v379 = vlaneseq
        %v380 = vshrl.u32 %v379, 7
        %v381 = vadd.s32 %v380, 16
        %382 = vset.pattern.permute.xlu0 %v381
        %383 = vperm.xlu0 %382, %v366
        %v384 = vpop.permute.xlu0 %383
        %v385 = vperm.slane %v250, 7
        %v386 = vlaneseq
        %v387 = vshrl.u32 %v386, 7
        %389 = vset.pattern.permute.xlu0 %v387
        %390 = vperm.xlu0 %389, %v385
        %v391 = vpop.permute.xlu0 %390
        %v392 = vlaneseq
        %v393 = vshrl.u32 %v392, 7
        %v394 = vadd.s32 %v393, 8
        %395 = vset.pattern.permute.xlu0 %v394
        %396 = vperm.xlu0 %395, %v385
        %v397 = vpop.permute.xlu0 %396
        %v398 = vlaneseq
        %v399 = vshrl.u32 %v398, 7
        %v400 = vadd.s32 %v399, 16
        %401 = vset.pattern.permute.xlu0 %v400
        %402 = vperm.xlu0 %401, %v385
        %v403 = vpop.permute.xlu0 %402
        %v405 = vrot.slane %v250, 1
        %v406 = vrot.slane %v250, 2
        %v407 = vrot.slane %v250, 3
        %v408 = vrot.slane %v250, 4
        %v409 = vrot.slane %v250, 5
        %v410 = vrot.slane %v250, 6
        %v411 = vrot.slane %v250, 7
        %v412 = vperm.slane %v250, 0
        %v413 = vperm.slane %v405, 0
        %v414 = vperm.slane %v406, 0
        %v415 = vperm.slane %v407, 0
        %v416 = vperm.slane %v408, 0
        %v417 = vperm.slane %v409, 0
        %v418 = vperm.slane %v410, 0
        %v419 = vperm.slane %v411, 0
        %v428 = vmul.f32 %v258, %v412
        %v429 = vmul.f32 %v264, %v412
        %v430 = vmul.f32 %v270, %v412
        %v431 = vmul.f32 %v277, %v413
        %v432 = vmul.f32 %v283, %v413
        %v433 = vmul.f32 %v289, %v413
        %v434 = vmul.f32 %v296, %v414
        %v435 = vmul.f32 %v302, %v414
        %v436 = vmul.f32 %v308, %v414
        %v437 = vmul.f32 %v315, %v415
        %v438 = vmul.f32 %v321, %v415
        %v439 = vmul.f32 %v327, %v415
        %v440 = vmul.f32 %v334, %v416
        %v441 = vmul.f32 %v340, %v416
        %v442 = vmul.f32 %v346, %v416
        %v443 = vmul.f32 %v353, %v417
        %v444 = vmul.f32 %v359, %v417
        %v445 = vmul.f32 %v365, %v417
        %v446 = vmul.f32 %v372, %v418
        %v447 = vmul.f32 %v378, %v418
        %v448 = vmul.f32 %v384, %v418
        %v449 = vmul.f32 %v391, %v419
        %v450 = vmul.f32 %v397, %v419
        %v451 = vmul.f32 %v403, %v419
        %452 = vst.msk [vmem:[%s204] sm:$0xff] %vm219, %v428
        %453 = vst.msk [vmem:[%s204 + $0x8] sm:$0xff] %vm219, %v429
        %vm454 = vcmask 158720
        %455 = vst.msk [vmem:[%s204 + $0x10] sm:$0xf] %vm454, %v430
        %456 = vst.msk [vmem:[%s204 + $0x18] sm:$0xff] %vm219, %v431
        %457 = vst.msk [vmem:[%s204 + $0x20] sm:$0xff] %vm219, %v432
        %458 = vst.msk [vmem:[%s204 + $0x28] sm:$0xf] %vm454, %v433
        %459 = vst.msk [vmem:[%s204 + $0x30] sm:$0xff] %vm219, %v434
        %460 = vst.msk [vmem:[%s204 + $0x38] sm:$0xff] %vm219, %v435
        %461 = vst.msk [vmem:[%s204 + $0x40] sm:$0xf] %vm454, %v436
        %462 = vst.msk [vmem:[%s204 + $0x48] sm:$0xff] %vm219, %v437
        %463 = vst.msk [vmem:[%s204 + $0x50] sm:$0xff] %vm219, %v438
        %464 = vst.msk [vmem:[%s204 + $0x58] sm:$0xf] %vm454, %v439
        %465 = vst.msk [vmem:[%s204 + $0x60] sm:$0xff] %vm219, %v440
        %466 = vst.msk [vmem:[%s204 + $0x68] sm:$0xff] %vm219, %v441
        %467 = vst.msk [vmem:[%s204 + $0x70] sm:$0xf] %vm454, %v442
        %468 = vst.msk [vmem:[%s204 + $0x78] sm:$0xff] %vm219, %v443
        %469 = vst.msk [vmem:[%s204 + $0x80] sm:$0xff] %vm219, %v444
        %470 = vst.msk [vmem:[%s204 + $0x88] sm:$0xf] %vm454, %v445
        %471 = vst.msk [vmem:[%s204 + $0x90] sm:$0xff] %vm219, %v446
        %472 = vst.msk [vmem:[%s204 + $0x98] sm:$0xff] %vm219, %v447
        %473 = vst.msk [vmem:[%s204 + $0xa0] sm:$0xf] %vm454, %v448
        %474 = vst.msk [vmem:[%s204 + $0xa8] sm:$0xff] %vm219, %v449
        %475 = vst.msk [vmem:[%s204 + $0xb0] sm:$0xff] %vm219, %v450
        %476 = vst.msk [vmem:[%s204 + $0xb8] sm:$0xf] %vm454, %v451
        %s477 = sand.u32 %s97, 1
        %s478 = scalar_lea.sflag [#allocation4], %s477
        %s479 = sand.u32 %s97, 1
        %s480 = smul.addr %s479, 192
        %s481 = scalar_lea.vmem [#allocation7], %s480
        // Predicated region
        $region41: #{tpu_custom_call.1} parent=31 // pred_check
          %p482 = pneg %p107
        $region42: #{tpu_custom_call.1} parent=31 // pred_check_branch
          %484 = sbr.rel (%p482) target = $region44
        $region43: #{tpu_custom_call.1} parent=31 // pred_region
          %s485 = smul.u32 8, %s21
          %s486 = ssub.s32 10, %s485
          %p487 = scmp.lt.s32.totalorder %s486, 8
          %s488 = scalar_select %p487, %s486, 8
          %s489 = smul.u32 8, %s488
          %s490 = smul.u32 %s489, 3
          %s491 = ssub.s32 192, %s490
          %s492 = sshll.u32 %s491, 4
          %493 = vsyncadd %s478, %s492
          %p494 = scmp.ne.s32.totalorder 0, %s490
          %s495 = smul.addr %s485, 3
          %s496 = smul.addr %s495, 8
          %s497 = scalar_lea.hbm %s3, %s496
          %s498 = smul.u32 %s488, 3
          %s499 = smul.u32 8, %s498
          %s500 = sshll.u32 %s481, 4
          %s501 = int_to_ptr.vmem [resolvable:$true] %s500
          %s502 = sshll.u32 %s497, 4
          %s503 = int_to_ptr.hbm [resolvable:$true] %s502
          %s504 = sshll.u32 %s499, 4
          %508 = dma.vmem_to_hbm [thread:$0]  (%p494), %s501, %s504, %s503, %s478, 128, 128, 8
        $region44: #{tpu_custom_call.1} parent=31 // pred_fallthru
          _
      $region32: #{tpu_custom_call.1} parent=5 // pred_fallthru
        _
      %p509 = scmp.le.s32.totalorder 2, %s16
      // Predicated region
      $region45: #{tpu_custom_call.1} parent=5 // pred_check
        %p510 = pneg %p509
      $region46: #{tpu_custom_call.1} parent=5 // pred_check_branch
        %512 = sbr.rel (%p510) target = $region48
      $region47: #{tpu_custom_call.1} parent=5 // pred_region
        %s513 = ssub.s32 %s16, 2
        // Predicated region
        $region49: #{tpu_custom_call.1} parent=47 // pred_check
          %p514 = pneg %p113
        $region50: #{tpu_custom_call.1} parent=47 // pred_check_branch
          %516 = sbr.rel (%p514) target = $region52
        $region51: #{tpu_custom_call.1} parent=47 // pred_region
          %s517 = sand.u32 %s98, 1
          %s518 = scalar_lea.sflag [#allocation4], %s517
          %s519 = sand.u32 %s98, 1
          %s520 = smul.addr %s519, 192
          %s521 = scalar_lea.vmem [#allocation7], %s520
          %523 = dma.done %s518, 3072
        $region52: #{tpu_custom_call.1} parent=47 // pred_fallthru
          _
      $region48: #{tpu_custom_call.1} parent=5 // pred_fallthru
        _
    $region6: #{tpu_custom_call.1} parent=1 // loop_footer
      %s20 = sadd.s32 1, %s16
    $region7: #{tpu_custom_call.1} parent=1 // loop_footer_branch
      %15 = sbr.rel target = $region3
    $region8: #{tpu_custom_call.1} parent=1 // loop_exit
      _
    %524 = vsyncpa [#allocation3], 1
    %s525 = scalar_lea.sflag [#allocation3], 1
    %526 = vsyncpa %s525, 1
    %527 = vsyncpa [#allocation6], 1
    %528 = vsyncpa [#allocation4], 1
    %s529 = scalar_lea.sflag [#allocation4], 1
    %530 = vsyncpa %s529, 1

</llo_original>
